<compile_context>
chip_gen: v5e
topology: v5e:2x2
jax: 0.10.0
libtpu: 0.0.40
codegen_flags: <defaults>
</compile_context>

<pallas_src>
import jax
import jax.numpy as jnp
from jax import lax
from jax.experimental import pallas as pl
from jax.experimental.pallas import tpu as pltpu


def _round_up(a, m):
    return ((a + m - 1) // m) * m


def _mlp_logsoftmax_kernel(x_ref, w1_ref, b1_ref, w2_ref, b2_ref, oT_ref):
    # x_ref : (TB, D_in)    natural row-major batch block (no host pad/transpose)
    # w1_ref: (D_hid, D_in) PyTorch nn.Linear (out, in) layout
    # b1_ref: (D_hid, 1)
    # w2_ref: (D_out, D_hid)
    # b2_ref: (D_out, 1)
    # oT_ref: (D_out, TB)   classes on sublanes, batch on lanes -> lane-dense store
    x = x_ref[...]
    w1 = w1_ref[...]
    w2 = w2_ref[...]

    # Linear 1 + ReLU: contract d_in of w1 with d_in of x directly, so the batch
    # lands on lanes of the result.  f32 accumulation on the MXU.
    h = lax.dot_general(w1, x, (((1,), (1,)), ((), ())),
                        preferred_element_type=jnp.float32)            # (D_hid, TB)
    h = jnp.maximum(h + b1_ref[...], 0.0)

    # Linear 2 (cast of h to the weight dtype is a no-op in f32 mode).
    logits = jnp.dot(w2, h.astype(w2.dtype),
                     preferred_element_type=jnp.float32) + b2_ref[...]  # (D_out, TB)

    # LogSoftmax over the class axis (sublanes -> no cross-lane XLU reduce).
    d_out = logits.shape[0]
    if d_out == 2:
        # Specialized, numerically stable 2-class form (exp/log1p run on the EUP).
        l0 = logits[0:1, :]
        l1 = logits[1:2, :]
        m = jnp.maximum(l0, l1)
        lse = m + jnp.log1p(jnp.exp(-jnp.abs(l0 - l1)))
    else:
        m = jnp.max(logits, axis=0, keepdims=True)
        lse = m + jnp.log(jnp.sum(jnp.exp(logits - m), axis=0, keepdims=True))

    oT_ref[...] = (logits - lse).astype(oT_ref.dtype)


def simple_network_forward(x, w1, b1, w2, b2, *, batch_tile=16384,
                           cast_to_bf16=False, transposed_output=False):
    """Fused Linear -> ReLU -> Linear -> LogSoftmax forward.

    x : (B, D_in)                       -- natural layout, no host relayout
    w1: (D_hid, D_in), b1: (D_hid,)     -- PyTorch nn.Linear (out, in) layout
    w2: (D_out, D_hid), b2: (D_out,)
    Returns (B, D_out) f32 log-probs, or (D_out, B) zero-copy if
    transposed_output=True.
    """
    B, d_in = x.shape
    d_hid, _ = w1.shape
    d_out, _ = w2.shape
    lane = 128

    # Optional bf16 feed for DMA/MXU; all elementwise math stays f32 in-kernel.
    # Note: the real win needs the producer to already emit bf16 x, otherwise
    # the cast itself is an extra HBM pass.
    if cast_to_bf16 or x.dtype == jnp.bfloat16:
        compute_dtype = jnp.bfloat16
    else:
        compute_dtype = x.dtype
    itemsize = jnp.dtype(compute_dtype).itemsize
    x_in = x.astype(compute_dtype)
    w1_in = w1.astype(compute_dtype)
    w2_in = w2.astype(compute_dtype)
    b1c = b1.astype(jnp.float32).reshape(d_hid, 1)
    b2c = b2.astype(jnp.float32).reshape(d_out, 1)

    # ---- batch-tile selection ---------------------------------------------
    # Big tiles amortize the ~0.35us per-grid-step overhead (feedback item 2).
    tb = max(lane, (min(batch_tile, _round_up(B, lane)) // lane) * lane)

    # v7x has 2 TensorCores: ensure >=2 (ideally an even count of) batch tiles
    # when B is large enough to split.  No-op on single-TC v5e/v6e.
    if B >= 2 * lane:
        tb = min(tb, _round_up(pl.cdiv(B, 2), lane))
        n_tiles = pl.cdiv(B, tb)
        if n_tiles > 2 and n_tiles % 2 == 1:
            tb_even = _round_up(pl.cdiv(B, n_tiles + 1), lane)
            if tb_even >= 8 * lane:   # don't shrink back into overhead-bound land
                tb = tb_even

    # ---- VMEM guard (v7x has only 64 MiB/TC) --------------------------------
    # x blocks are lane-padded (d_in -> 128) in VMEM; keep the double-buffered
    # working set under ~40 MiB and the scoped limit <= 48 MiB.
    def vmem_estimate(tile):
        x_blk = tile * _round_up(d_in, lane) * itemsize
        o_blk = _round_up(d_out, 8) * tile * 4
        h_blk = _round_up(d_hid, 8) * tile * 4           # f32 intermediate
        w_all = 4 * (d_hid * _round_up(d_in, lane)
                     + _round_up(d_out, 8) * _round_up(d_hid, lane)
                     + d_hid + d_out)
        return 2 * x_blk + 2 * o_blk + h_blk + w_all + (2 << 20)

    vmem_budget = 40 * 1024 * 1024
    while tb > lane and vmem_estimate(tb) > vmem_budget:
        tb = max(lane, ((tb // 2) // lane) * lane)

    n_tiles = pl.cdiv(B, tb)
    vmem_limit = int(min(48 * 1024 * 1024,
                         max(32 * 1024 * 1024, int(vmem_estimate(tb) * 1.25))))

    # Cost estimate reflects the real (relayout-free) traffic.
    cost = pl.CostEstimate(
        flops=2 * B * (d_in * d_hid + d_hid * d_out),
        transcendentals=2 * B,
        bytes_accessed=(B * d_in * itemsize + B * d_out * 4
                        + itemsize * (d_hid * d_in + d_out * d_hid)
                        + 4 * (d_hid + d_out)),
    )

    out_nb = pl.pallas_call(
        _mlp_logsoftmax_kernel,
        out_shape=jax.ShapeDtypeStruct((d_out, B), jnp.float32),
        grid_spec=pltpu.PrefetchScalarGridSpec(
            num_scalar_prefetch=0,
            grid=(n_tiles,),
            in_specs=[
                # x streamed in natural (B, d_in) layout; ragged last block is
                # handled by Pallas (no host-side pad).  If a trace ever shows
                # the x DMA exposed, add pipeline_mode=pl.Buffered(3) here.
                pl.BlockSpec((tb, d_in), lambda i: (i, 0)),
                # Weights/biases: constant index_map -> fetched once, resident.
                pl.BlockSpec((d_hid, d_in), lambda i: (0, 0)),
                pl.BlockSpec((d_hid, 1), lambda i: (0, 0)),
                pl.BlockSpec((d_out, d_hid), lambda i: (0, 0)),
                pl.BlockSpec((d_out, 1), lambda i: (0, 0)),
            ],
            # Lane-dense output tiles; ragged last block is masked on writeback.
            out_specs=pl.BlockSpec((d_out, tb), lambda i: (0, i)),
        ),
        compiler_params=pltpu.CompilerParams(
            dimension_semantics=("parallel",),   # v7x: split batch tiles over 2 TCs
            vmem_limit_bytes=vmem_limit,
        ),
        cost_estimate=cost,
    )(x_in, w1_in, b1c, w2_in, b2c)

    if transposed_output:
        return out_nb            # (D_out, B): zero-copy layout contract
    return out_nb.T              # (B, D_out): PyTorch-compatible (8 B/sample copy)


def _ref_forward(x, w1, b1, w2, b2):
    """Pure-JAX reference (PyTorch semantics: x @ W.T + b)."""
    h = jnp.maximum(x @ w1.T + b1, 0.0)
    logits = h @ w2.T + b2
    return jax.nn.log_softmax(logits, axis=-1)


if __name__ == "__main__":
    input_dim, hidden_dim, output_dim = 4, 64, 2
    batch = 8

    key = jax.random.PRNGKey(0)
    kx, kw1, kb1, kw2, kb2, kx2 = jax.random.split(key, 6)

    # Deterministic "checkpoint" in PyTorch layout: W is (out, in).
    x = jax.random.normal(kx, (batch, input_dim), dtype=jnp.float32)
    w1 = jax.random.normal(kw1, (hidden_dim, input_dim), dtype=jnp.float32) * 0.1
    b1 = jax.random.normal(kb1, (hidden_dim,), dtype=jnp.float32) * 0.1
    w2 = jax.random.normal(kw2, (output_dim, hidden_dim), dtype=jnp.float32) * 0.1
    b2 = jax.random.normal(kb2, (output_dim,), dtype=jnp.float32) * 0.1

    out = simple_network_forward(x, w1, b1, w2, b2)
    out = jax.block_until_ready(out)
    ref = _ref_forward(x, w1, b1, w2, b2)
    assert out.shape == (batch, output_dim)
    assert jnp.allclose(out, ref, atol=1e-5, rtol=1e-5), "mismatch vs reference (B=8)"

    # Second check: non-lane-aligned batch, multi-tile grid (exercises the
    # ragged last block and the 2-tile v7x split path).
    x2 = jax.random.normal(kx2, (300, input_dim), dtype=jnp.float32)
    out2 = jax.block_until_ready(simple_network_forward(x2, w1, b1, w2, b2))
    ref2 = _ref_forward(x2, w1, b1, w2, b2)
    assert out2.shape == (300, output_dim)
    assert jnp.allclose(out2, ref2, atol=1e-5, rtol=1e-5), "mismatch vs reference (B=300)"

    print("KERNEL_OK")
</pallas_src>

<mosaic_0001>
module attributes {stable_mosaic.version = 11 : i64} {
  func.func @_mlp_logsoftmax_kernel(%arg0: i32, %arg1: memref<128x4xf32, #tpu.memory_space<vmem>>, %arg2: memref<64x4xf32, #tpu.memory_space<vmem>>, %arg3: memref<64x1xf32, #tpu.memory_space<vmem>>, %arg4: memref<2x64xf32, #tpu.memory_space<vmem>>, %arg5: memref<2x1xf32, #tpu.memory_space<vmem>>, %arg6: memref<2x128xf32, #tpu.memory_space<vmem>>) attributes {dimension_semantics = [#tpu.dimension_semantics<parallel>], iteration_bounds = array<i64: 1>, scalar_prefetch = 0 : i64, scratch_operands = 0 : i64, tpu.core_type = #tpu.core_type<tc>, window_params = [{transform_indices = @transform_0, window_bounds = array<i64: 128, 4>}, {pipeline_mode = #tpu.pipeline_mode<synchronous>, transform_indices = @transform_1, window_bounds = array<i64: 64, 4>}, {pipeline_mode = #tpu.pipeline_mode<synchronous>, transform_indices = @transform_2, window_bounds = array<i64: 64, 1>}, {pipeline_mode = #tpu.pipeline_mode<synchronous>, transform_indices = @transform_3, window_bounds = array<i64: 2, 64>}, {pipeline_mode = #tpu.pipeline_mode<synchronous>, transform_indices = @transform_4, window_bounds = array<i64: 2, 1>}, {transform_indices = @transform_5, window_bounds = array<i64: 2, 128>}]} {
    %c0 = arith.constant 0 : index
    %c0_0 = arith.constant 0 : index
    %0 = vector.load %arg1[%c0, %c0_0] : memref<128x4xf32, #tpu.memory_space<vmem>>, vector<128x4xf32>
    %c0_1 = arith.constant 0 : index
    %c0_2 = arith.constant 0 : index
    %1 = vector.load %arg2[%c0_1, %c0_2] : memref<64x4xf32, #tpu.memory_space<vmem>>, vector<64x4xf32>
    %c0_3 = arith.constant 0 : index
    %c0_4 = arith.constant 0 : index
    %2 = vector.load %arg4[%c0_3, %c0_4] : memref<2x64xf32, #tpu.memory_space<vmem>>, vector<2x64xf32>
    %cst = arith.constant dense<0.000000e+00> : vector<64x128xf32>
    %3 = tpu.matmul %1, %0, %cst {dimension_numbers = #tpu.dot_dimension_numbers<[1], [1], [0], [0], [0, 0, 1, 0], [], []>} : vector<64x4xf32>, vector<128x4xf32>, vector<64x128xf32> -> vector<64x128xf32>
    %c0_5 = arith.constant 0 : index
    %c0_6 = arith.constant 0 : index
    %4 = vector.load %arg3[%c0_5, %c0_6] : memref<64x1xf32, #tpu.memory_space<vmem>>, vector<64x1xf32>
    %5 = vector.broadcast %4 : vector<64x1xf32> to vector<64x128xf32>
    %6 = arith.addf %3, %5 : vector<64x128xf32>
    %cst_7 = arith.constant 0.000000e+00 : f32
    %7 = vector.broadcast %cst_7 : f32 to vector<64x128xf32>
    %8 = arith.maximumf %6, %7 : vector<64x128xf32>
    %cst_8 = arith.constant dense<0.000000e+00> : vector<2x128xf32>
    %9 = tpu.matmul %2, %8, %cst_8 {dimension_numbers = #tpu.dot_dimension_numbers<[1], [0], [0], [1], [0, 0, 1, 1], [], []>} : vector<2x64xf32>, vector<64x128xf32>, vector<2x128xf32> -> vector<2x128xf32>
    %c0_9 = arith.constant 0 : index
    %c0_10 = arith.constant 0 : index
    %10 = vector.load %arg5[%c0_9, %c0_10] : memref<2x1xf32, #tpu.memory_space<vmem>>, vector<2x1xf32>
    %11 = vector.broadcast %10 : vector<2x1xf32> to vector<2x128xf32>
    %12 = arith.addf %9, %11 : vector<2x128xf32>
    %13 = vector.extract_strided_slice %12 {offsets = [0, 0], sizes = [1, 128], strides = [1, 1]} : vector<2x128xf32> to vector<1x128xf32>
    %14 = vector.extract_strided_slice %12 {offsets = [1, 0], sizes = [1, 128], strides = [1, 1]} : vector<2x128xf32> to vector<1x128xf32>
    %15 = arith.maximumf %13, %14 : vector<1x128xf32>
    %16 = arith.subf %13, %14 : vector<1x128xf32>
    %17 = math.absf %16 : vector<1x128xf32>
    %cst_11 = arith.constant 0.000000e+00 : f32
    %18 = vector.broadcast %cst_11 : f32 to vector<1x128xf32>
    %19 = arith.subf %18, %17 : vector<1x128xf32>
    %20 = math.exp %19 : vector<1x128xf32>
    %21 = math.log1p %20 : vector<1x128xf32>
    %22 = arith.addf %15, %21 : vector<1x128xf32>
    %23 = vector.broadcast %22 : vector<1x128xf32> to vector<2x128xf32>
    %24 = arith.subf %12, %23 : vector<2x128xf32>
    %c0_12 = arith.constant 0 : index
    %c0_13 = arith.constant 0 : index
    %25 = vector.load %arg6[%c0_12, %c0_13] : memref<2x128xf32, #tpu.memory_space<vmem>>, vector<2x128xf32>
    tpu.vector_store %arg6[%c0_12, %c0_13], %24 {strides = array<i32>} : memref<2x128xf32, #tpu.memory_space<vmem>>, vector<2x128xf32>,
    return
  }
  func.func @transform_0(%arg0: i32) -> (i32, i32) {
    %c0_i32 = arith.constant 0 : i32
    %c0_i32_0 = arith.constant 0 : i32
    return %arg0, %c0_i32 : i32, i32
  }
  func.func @transform_1(%arg0: i32) -> (i32, i32) {
    %c0_i32 = arith.constant 0 : i32
    %c0_i32_0 = arith.constant 0 : i32
    %c0_i32_1 = arith.constant 0 : i32
    return %c0_i32, %c0_i32_0 : i32, i32
  }
  func.func @transform_2(%arg0: i32) -> (i32, i32) {
    %c0_i32 = arith.constant 0 : i32
    %c0_i32_0 = arith.constant 0 : i32
    %c0_i32_1 = arith.constant 0 : i32
    return %c0_i32, %c0_i32_0 : i32, i32
  }
  func.func @transform_3(%arg0: i32) -> (i32, i32) {
    %c0_i32 = arith.constant 0 : i32
    %c0_i32_0 = arith.constant 0 : i32
    %c0_i32_1 = arith.constant 0 : i32
    return %c0_i32, %c0_i32_0 : i32, i32
  }
  func.func @transform_4(%arg0: i32) -> (i32, i32) {
    %c0_i32 = arith.constant 0 : i32
    %c0_i32_0 = arith.constant 0 : i32
    %c0_i32_1 = arith.constant 0 : i32
    return %c0_i32, %c0_i32_0 : i32, i32
  }
  func.func @transform_5(%arg0: i32) -> (i32, i32) {
    %c0_i32 = arith.constant 0 : i32
    %c0_i32_0 = arith.constant 0 : i32
    return %c0_i32, %arg0 : i32, i32
  }
}

</mosaic_0001>

<llo_original>
// kernel: tpu_custom_call.1
$region0: #{tpu_custom_call.1}
  #allocation0 [shape = 'u32[]', space=smem, size = 0x4, offset = 0x4, fixed_abs, tag = 'smem constant byte address 0x4 - core index']
  #allocation1 [shape = 'u32[72,128]{1,0:T(1,128)}', space=vmem, size = 0x9000, scoped, tag = 'internal scratch']
  %s0 = inlined_call_operand.vmem [shape: f32[8,4], index: 0, kind: input, shape index: {}]
  %s1 = inlined_call_operand.vmem [shape: f32[64,4], index: 1, kind: input, shape index: {}]
  %s2 = inlined_call_operand.vmem [shape: f32[64,1], index: 2, kind: input, shape index: {}]
  %s3 = inlined_call_operand.vmem [shape: f32[2,64], index: 3, kind: input, shape index: {}]
  %s4 = inlined_call_operand.vmem [shape: f32[2,1], index: 4, kind: input, shape index: {}]
  %s5 = inlined_call_operand.hbm [shape: f32[2,8], index: 5, kind: output, shape index: {}]
  %s6 = sld [smem:[#allocation0]]
  $region30: #{tpu_custom_call.1} parent=0
    _
  %s8 = ssub.s32 1, %s6
  %s9 = scalar_select 0, %s8, %s6
  $region1: #{tpu_custom_call.1} parent=0
    #allocation2 [shape = 'u8[1024]{0}', space=vmem, size = 0x400, scoped, tag = 'output window, operand 0, single buffered']
    #allocation3 [shape = 's32[1]{0}', space=sflag, size = 0x4, scoped, tag = 'scoped memory for tpu_custom_call.1']
    %10 = vsyncpa [#allocation3], 0
    // Predicated region
    $region2: #{tpu_custom_call.1} parent=1 // pred_check
      _
    $region3: #{tpu_custom_call.1} parent=1 // pred_check_branch
      %12 = sbr.rel (0) target = $region5
    $region4: #{tpu_custom_call.1} parent=1 // pred_region
      _
    $region5: #{tpu_custom_call.1} parent=1 // pred_fallthru
      _
    // Predicated region
    $region6: #{tpu_custom_call.1} parent=1 // pred_check
      _
    $region7: #{tpu_custom_call.1} parent=1 // pred_check_branch
      %14 = sbr.rel (0) target = $region9
    $region8: #{tpu_custom_call.1} parent=1 // pred_region
      _
    $region9: #{tpu_custom_call.1} parent=1 // pred_fallthru
      _
    // Predicated region
    $region10: #{tpu_custom_call.1} parent=1 // pred_check
      _
    $region11: #{tpu_custom_call.1} parent=1 // pred_check_branch
      %16 = sbr.rel (0) target = $region13
    $region12: #{tpu_custom_call.1} parent=1 // pred_region
      _
    $region13: #{tpu_custom_call.1} parent=1 // pred_fallthru
      _
    // Predicated region
    $region14: #{tpu_custom_call.1} parent=1 // pred_check
      _
    $region15: #{tpu_custom_call.1} parent=1 // pred_check_branch
      %18 = sbr.rel (0) target = $region17
    $region16: #{tpu_custom_call.1} parent=1 // pred_region
      _
    $region17: #{tpu_custom_call.1} parent=1 // pred_fallthru
      _
    // Predicated region
    $region18: #{tpu_custom_call.1} parent=1 // pred_check
      _
    $region19: #{tpu_custom_call.1} parent=1 // pred_check_branch
      %20 = sbr.rel (0) target = $region21
    $region20: #{tpu_custom_call.1} parent=1 // pred_region
      _
    $region21: #{tpu_custom_call.1} parent=1 // pred_fallthru
      _
    %v21 = vld [vmem:[%s0] sm:$0xff]
    %v22 = vld [vmem:[%s0 + $0x8] sm:$0xff]
    %v23 = vld [vmem:[%s0 + $0x10] sm:$0xff]
    %v24 = vld [vmem:[%s0 + $0x18] sm:$0xff]
    %v25 = vld [vmem:[%s0 + $0x20] sm:$0xff]
    %v26 = vld [vmem:[%s0 + $0x28] sm:$0xff]
    %v27 = vld [vmem:[%s0 + $0x30] sm:$0xff]
    %v28 = vld [vmem:[%s0 + $0x38] sm:$0xff]
    %v29 = vld [vmem:[%s0 + $0x40] sm:$0xff]
    %v30 = vld [vmem:[%s0 + $0x48] sm:$0xff]
    %v31 = vld [vmem:[%s0 + $0x50] sm:$0xff]
    %v32 = vld [vmem:[%s0 + $0x58] sm:$0xff]
    %v33 = vld [vmem:[%s0 + $0x60] sm:$0xff]
    %v34 = vld [vmem:[%s0 + $0x68] sm:$0xff]
    %v35 = vld [vmem:[%s0 + $0x70] sm:$0xff]
    %v36 = vld [vmem:[%s0 + $0x78] sm:$0xff]
    %v37 = vld [vmem:[%s1] sm:$0xff]
    %v38 = vld [vmem:[%s1 + $0x8] sm:$0xff]
    %v39 = vld [vmem:[%s1 + $0x10] sm:$0xff]
    %v40 = vld [vmem:[%s1 + $0x18] sm:$0xff]
    %v41 = vld [vmem:[%s1 + $0x20] sm:$0xff]
    %v42 = vld [vmem:[%s1 + $0x28] sm:$0xff]
    %v43 = vld [vmem:[%s1 + $0x30] sm:$0xff]
    %v44 = vld [vmem:[%s1 + $0x38] sm:$0xff]
    %v45 = vld [vmem:[%s3] sm:$0x3]
    %v46 = vld [vmem:[%s2] sm:$0xff]
    %v47 = vld [vmem:[%s2 + $0x8] sm:$0xff]
    %v48 = vld [vmem:[%s2 + $0x10] sm:$0xff]
    %v49 = vld [vmem:[%s2 + $0x18] sm:$0xff]
    %v50 = vld [vmem:[%s2 + $0x20] sm:$0xff]
    %v51 = vld [vmem:[%s2 + $0x28] sm:$0xff]
    %v52 = vld [vmem:[%s2 + $0x30] sm:$0xff]
    %v53 = vld [vmem:[%s2 + $0x38] sm:$0xff]
    %55 = vset.pattern.permute.xlu0 0
    %56 = vperm.xlu0 %55, %v46
    %v57 = vpop.permute.xlu0 %56
    %60 = vset.pattern.permute.xlu0 0
    %61 = vperm.xlu0 %60, %v47
    %v62 = vpop.permute.xlu0 %61
    %65 = vset.pattern.permute.xlu0 0
    %66 = vperm.xlu0 %65, %v48
    %v67 = vpop.permute.xlu0 %66
    %70 = vset.pattern.permute.xlu0 0
    %71 = vperm.xlu0 %70, %v49
    %v72 = vpop.permute.xlu0 %71
    %75 = vset.pattern.permute.xlu0 0
    %76 = vperm.xlu0 %75, %v50
    %v77 = vpop.permute.xlu0 %76
    %80 = vset.pattern.permute.xlu0 0
    %81 = vperm.xlu0 %80, %v51
    %v82 = vpop.permute.xlu0 %81
    %85 = vset.pattern.permute.xlu0 0
    %86 = vperm.xlu0 %85, %v52
    %v87 = vpop.permute.xlu0 %86
    %90 = vset.pattern.permute.xlu0 0
    %91 = vperm.xlu0 %90, %v53
    %v92 = vpop.permute.xlu0 %91
    %vm94 = vcmask 31744
    %v96 = vsel %vm94, %v37, 0
    %v99 = vsel %vm94, %v38, 0
    %v102 = vsel %vm94, %v39, 0
    %v105 = vsel %vm94, %v40, 0
    %v108 = vsel %vm94, %v41, 0
    %v111 = vsel %vm94, %v42, 0
    %v114 = vsel %vm94, %v43, 0
    %v117 = vsel %vm94, %v44, 0
    %v120 = vsel %vm94, %v21, 0
    %v123 = vsel %vm94, %v22, 0
    %v126 = vsel %vm94, %v23, 0
    %v129 = vsel %vm94, %v24, 0
    %v132 = vsel %vm94, %v25, 0
    %v135 = vsel %vm94, %v26, 0
    %v138 = vsel %vm94, %v27, 0
    %v141 = vsel %vm94, %v28, 0
    %v144 = vsel %vm94, %v29, 0
    %v147 = vsel %vm94, %v30, 0
    %v150 = vsel %vm94, %v31, 0
    %v153 = vsel %vm94, %v32, 0
    %v156 = vsel %vm94, %v33, 0
    %v159 = vsel %vm94, %v34, 0
    %v162 = vsel %vm94, %v35, 0
    %v165 = vsel %vm94, %v36, 0
    %167 = vmatpush.xpose.msra.mxu0 %v165
    %168 = vmatpush.xpose.msra.mxu0 %v162
    %169 = vmatpush.xpose.msra.mxu0 %v159
    %170 = vmatpush.xpose.msra.mxu0 %v156
    %171 = vmatpush.xpose.msra.mxu0 %v153
    %172 = vmatpush.xpose.msra.mxu0 %v150
    %173 = vmatpush.xpose.msra.mxu0 %v147
    %174 = vmatpush.xpose.msra.mxu0 %v144
    %175 = vmatpush.xpose.msra.mxu0 %v141
    %176 = vmatpush.xpose.msra.mxu0 %v138
    %177 = vmatpush.xpose.msra.mxu0 %v135
    %178 = vmatpush.xpose.msra.mxu0 %v132
    %179 = vmatpush.xpose.msra.mxu0 %v129
    %180 = vmatpush.xpose.msra.mxu0 %v126
    %181 = vmatpush.xpose.msra.mxu0 %v123
    %182 = vmatpush.xpose.msra.mxu0 %v120
    %183 = vmatmul.f32.gmra.mxu0 %v96
    %v184 = vpop.f32.mrf.mxu0
    %v185 = vadd.f32 %v57, %v184
    %186 = vmatmul.f32.gmra.mxu0 %v99
    %v187 = vpop.f32.mrf.mxu0
    %v188 = vadd.f32 %v62, %v187
    %189 = vmatmul.f32.gmra.mxu0 %v102
    %v190 = vpop.f32.mrf.mxu0
    %v191 = vadd.f32 %v67, %v190
    %192 = vmatmul.f32.gmra.mxu0 %v105
    %v193 = vpop.f32.mrf.mxu0
    %v194 = vadd.f32 %v72, %v193
    %195 = vmatmul.f32.gmra.mxu0 %v108
    %v196 = vpop.f32.mrf.mxu0
    %v197 = vadd.f32 %v77, %v196
    %198 = vmatmul.f32.gmra.mxu0 %v111
    %v199 = vpop.f32.mrf.mxu0
    %v200 = vadd.f32 %v82, %v199
    %201 = vmatmul.f32.gmra.mxu0 %v114
    %v202 = vpop.f32.mrf.mxu0
    %v203 = vadd.f32 %v87, %v202
    %204 = vmatmul.f32.gmra.mxu0 %v117
    %v205 = vpop.f32.mrf.mxu0
    %v206 = vadd.f32 %v92, %v205
    %207 = vdwg.mxu0
    %v208 = vmax.f32 %v185, 0.0
    %v209 = vmax.f32 %v188, 0.0
    %v210 = vmax.f32 %v191, 0.0
    %v211 = vmax.f32 %v194, 0.0
    %v212 = vmax.f32 %v197, 0.0
    %v213 = vmax.f32 %v200, 0.0
    %v214 = vmax.f32 %v203, 0.0
    %v215 = vmax.f32 %v206, 0.0
    %v216 = vld [vmem:[%s4] sm:$0x3]
    %218 = vset.pattern.permute.xlu0 0
    %219 = vperm.xlu0 %218, %v216
    %v220 = vpop.permute.xlu0 %219
    %vm222 = vcmask 523264
    %v224 = vsel %vm222, %v45, 0
    %226 = vmatpush.msra.mxu0 0.0
    %227 = vmatpush.msra.mxu0 0.0
    %228 = vmatpush.msra.mxu0 0.0
    %229 = vmatpush.msra.mxu0 0.0
    %230 = vmatpush.msra.mxu0 0.0
    %231 = vmatpush.msra.mxu0 0.0
    %232 = vmatpush.msra.mxu0 0.0
    %233 = vmatpush.msra.mxu0 0.0
    %234 = vmatpush.msra.mxu0 %v215
    %235 = vmatpush.msra.mxu0 %v214
    %236 = vmatpush.msra.mxu0 %v213
    %237 = vmatpush.msra.mxu0 %v212
    %238 = vmatpush.msra.mxu0 %v211
    %239 = vmatpush.msra.mxu0 %v210
    %240 = vmatpush.msra.mxu0 %v209
    %241 = vmatpush.msra.mxu0 %v208
    %242 = vmatmul.f32.gmra.mxu0 %v224
    %v243 = vpop.f32.mrf.mxu0
    %v244 = vadd.f32 %v220, %v243
    %245 = vdwg.mxu0
    %v247 = vrot.slane %v244, 1
    %v249 = vmax.f32 %v244, %v247
    %v250 = vsub.f32 %v244, %v247
    %v251 = vand.u32 2147483647, %v250
    %v252 = vsub.f32 0.0, %v251
    %v253 = vmul.f32 %v252, 1.442695
    %v254 = vpow.pop %v253
    %v255 = vadd.f32 %v254, 1.0
    %v256 = vlog2.pop %v255
    %v257 = vmul.f32 %v256, 0.6931472
    %v258 = vmul.f32 -0.5, %v254
    %v259 = vadd.f32 %v258, 1.0
    %v260 = vmul.f32 %v259, %v254
    %v261 = vand.u32 2147483647, %v254
    %vm262 = vcmp.lt.f32.partialorder %v261, 0.0004427343
    %v263 = vsel %vm262, %v260, %v257
    %v264 = vadd.f32 %v249, %v263
    %v265 = vperm.slane %v264, 0
    %v266 = vsub.f32 %v244, %v265
    %267 = vst [vmem:[#allocation2] sm:$0x3] %v266
    // Predicated region
    $region22: #{tpu_custom_call.1} parent=1 // pred_check
      _
    $region23: #{tpu_custom_call.1} parent=1 // pred_check_branch
      %269 = sbr.rel (0) target = $region25
    $region24: #{tpu_custom_call.1} parent=1 // pred_region
      %271 = vsyncadd [#allocation3], 0
      %s273 = sshll.u32 [#allocation2], 4
      %s274 = int_to_ptr.vmem [resolvable:$true] %s273
      %s275 = sshll.u32 %s5, 4
      %s276 = int_to_ptr.hbm [resolvable:$true] %s275
      %278 = dma.vmem_to_hbm [thread:$0]  %s274, 32, %s276, [#allocation3]
    $region25: #{tpu_custom_call.1} parent=1 // pred_fallthru
      _
    // Predicated region
    $region26: #{tpu_custom_call.1} parent=1 // pred_check
      _
    $region27: #{tpu_custom_call.1} parent=1 // pred_check_branch
      %280 = sbr.rel (0) target = $region29
    $region28: #{tpu_custom_call.1} parent=1 // pred_region
      %282 = dma.done [#allocation3], 32
    $region29: #{tpu_custom_call.1} parent=1 // pred_fallthru
      _
    %283 = vsyncpa [#allocation3], 1

</llo_original>
